<compile_context>
chip_gen: v5e
topology: v5e:2x2
jax: 0.10.0
libtpu: 0.0.40
codegen_flags: <defaults>
</compile_context>

<pallas_src>
import math

import jax
import jax.numpy as jnp
from jax import lax
from jax.experimental import pallas as pl
from jax.experimental.pallas import tpu as pltpu

# PyTorch uses -float('inf') in masked_fill; a finite large-negative value is
# used here so that the subsequent `* diag_mask` cannot produce NaN (0 * inf).
_MASK_FILL = -1e30


def _make_sdpa_kernel(inv_temperature, has_mask):
    """Fused attention kernel.

    Ref order: q, k, v, diag_mask, [mask], out, attn
      q         (1, tq, D)    f32
      k         (1, Lk, D)    f32
      v         (1, Lk, Dv)   f32
      diag_mask (1, tq, Lk)   f32 {0,1}
      mask      (1, tq, Lk)   f32 {0,1}  (optional; 1 => masked_fill)
      out       (1, tq, Dv)   f32
      attn      (1, tq, Lk)   f32
    """

    def kernel(*refs):
        if has_mask:
            q_ref, k_ref, v_ref, dmask_ref, mask_ref, out_ref, attn_ref = refs
        else:
            q_ref, k_ref, v_ref, dmask_ref, out_ref, attn_ref = refs

        q = q_ref[0] * inv_temperature          # (tq, D)  fold 1/temperature
        k = k_ref[0]                            # (Lk, D)
        v = v_ref[0]                            # (Lk, Dv)
        dmask = dmask_ref[0]                    # (tq, Lk)

        # scores = (q / temperature) @ k^T  -> (tq, Lk), f32 accumulate on MXU
        s = lax.dot_general(q, k, (((1,), (1,)), ((), ())),
                            preferred_element_type=jnp.float32)

        if has_mask:
            s = jnp.where(mask_ref[0] > 0.5, _MASK_FILL, s)

        # masked_softmax with memory_efficient=False (matches the module)
        sm = s * dmask
        m = jnp.max(sm, axis=-1, keepdims=True)
        e = jnp.exp(sm - m)
        p = e / jnp.sum(e, axis=-1, keepdims=True)
        p = p * dmask
        p = p / (jnp.sum(p, axis=-1, keepdims=True) + 1e-13)

        attn_ref[0] = p.astype(attn_ref.dtype)
        out_ref[0] = jnp.dot(p, v, preferred_element_type=jnp.float32
                             ).astype(out_ref.dtype)

    return kernel


def _pick_q_tile(lq, target=128):
    """Largest q tile <= target that divides Lq and keeps (8,128) legality."""
    if lq <= target:
        return lq                      # full-extent block is always legal
    for t in range(target, 7, -1):
        if lq % t == 0 and t % 8 == 0:
            return t
    return lq                          # fall back to the whole axis


def scaled_dot_product_attention(q, k, v, diag_mask, mask=None, *,
                                 temperature, q_tile=128):
    """q:(B,Lq,D), k:(B,Lk,D), v:(B,Lk,Dv), diag_mask:(B,Lq,Lk) in {0,1}.
    mask: optional (B,Lq,Lk) in {0,1}; 1 means masked_fill position."""
    q = q.astype(jnp.float32)
    k = k.astype(jnp.float32)
    v = v.astype(jnp.float32)
    diag_mask = diag_mask.astype(jnp.float32)

    B, Lq, D = q.shape
    _, Lk, Dk = k.shape
    _, _, Dv = v.shape
    assert Dk == D and k.shape[0] == B and v.shape[0] == B
    assert diag_mask.shape == (B, Lq, Lk)

    tq = _pick_q_tile(Lq, q_tile)
    grid = (B, Lq // tq)

    qmap = lambda b, i: (b, i, 0)      # tiled over (batch, q-tile)
    kvmap = lambda b, i: (b, 0, 0)     # full K/V per batch, constant over i

    in_specs = [
        pl.BlockSpec((1, tq, D), qmap),
        pl.BlockSpec((1, Lk, D), kvmap),
        pl.BlockSpec((1, Lk, Dv), kvmap),
        pl.BlockSpec((1, tq, Lk), qmap),
    ]
    inputs = [q, k, v, diag_mask]
    has_mask = mask is not None
    if has_mask:
        in_specs.append(pl.BlockSpec((1, tq, Lk), qmap))
        inputs.append(mask.astype(jnp.float32))

    out_specs = (
        pl.BlockSpec((1, tq, Dv), qmap),
        pl.BlockSpec((1, tq, Lk), qmap),
    )
    out_shape = (
        jax.ShapeDtypeStruct((B, Lq, Dv), jnp.float32),
        jax.ShapeDtypeStruct((B, Lq, Lk), jnp.float32),
    )

    fn = pl.pallas_call(
        _make_sdpa_kernel(1.0 / float(temperature), has_mask),
        out_shape=out_shape,
        grid_spec=pltpu.PrefetchScalarGridSpec(
            num_scalar_prefetch=0,
            grid=grid,
            in_specs=in_specs,
            out_specs=out_specs,
        ),
        compiler_params=pltpu.CompilerParams(
            dimension_semantics=("parallel", "parallel")),
    )
    output, attn = fn(*inputs)
    return output, attn


class ScaledDotProductAttentionPallas:
    """JAX/Pallas port of the PyTorch ScaledDotProductAttention module."""

    def __init__(self, temperature):
        self.temperature = float(temperature)

    def __call__(self, q, k, v, diag_mask, mask=None):
        return self.forward(q, k, v, diag_mask, mask)

    def forward(self, q, k, v, diag_mask, mask=None):
        B, Lq, _ = q.shape
        Lk = k.shape[1]
        # replicate masked_softmax's "unsqueeze(1) until same dim" broadcast
        dm = diag_mask.astype(jnp.float32)
        while dm.ndim < 3:
            dm = dm[:, None, ...]
        dm = jnp.broadcast_to(dm, (B, Lq, Lk))
        mk = None
        if mask is not None:
            mk = jnp.broadcast_to(mask.astype(jnp.float32), (B, Lq, Lk))
        return scaled_dot_product_attention(q, k, v, dm, mk,
                                            temperature=self.temperature)


def _reference(q, k, v, diag_mask, mask, temperature):
    """Pure-JAX reference of the same forward pass."""
    attn = jnp.einsum("bqd,bkd->bqk", q, k,
                      precision=lax.Precision.HIGHEST) / temperature
    if mask is not None:
        attn = jnp.where(mask > 0.5, _MASK_FILL, attn)
    dm = diag_mask.astype(jnp.float32)
    p = jax.nn.softmax(attn * dm, axis=-1)
    p = p * dm
    p = p / (p.sum(axis=-1, keepdims=True) + 1e-13)
    out = jnp.einsum("bqk,bkd->bqd", p, v, precision=lax.Precision.HIGHEST)
    return out, p


if __name__ == "__main__":
    key = jax.random.PRNGKey(0)
    kq, kk, kv = jax.random.split(key, 3)

    # Small but TPU-friendly shapes: Lk = 128 keeps the attn output lane-dense,
    # the q tile fills the MXU M dimension, head dim 64 is a full-extent block.
    B, L, D = 4, 128, 64
    temperature = math.sqrt(D)

    q = jax.random.normal(kq, (B, L, D), jnp.float32)
    k = jax.random.normal(kk, (B, L, D), jnp.float32)
    v = jax.random.normal(kv, (B, L, D), jnp.float32)
    # Hyper-SAGNN-style diag_mask: zero out self-attention on the diagonal.
    diag_mask = jnp.broadcast_to(1.0 - jnp.eye(L, dtype=jnp.float32), (B, L, L))

    sdpa = ScaledDotProductAttentionPallas(temperature)
    output, attn = sdpa.forward(q, k, v, diag_mask, mask=None)
    output = jax.block_until_ready(output)
    attn = jax.block_until_ready(attn)

    ref_out, ref_attn = _reference(q, k, v, diag_mask, None, temperature)
    assert output.shape == (B, L, D)
    assert attn.shape == (B, L, L)
    assert bool(jnp.allclose(attn, ref_attn, atol=2e-3, rtol=2e-3))
    assert bool(jnp.allclose(output, ref_out, atol=2e-3, rtol=2e-3))

    print("KERNEL_OK")
</pallas_src>

<mosaic_0001>
module attributes {stable_mosaic.version = 11 : i64} {
  func.func @kernel(%arg0: i32, %arg1: i32, %arg2: memref<1x128x64xf32, #tpu.memory_space<vmem>>, %arg3: memref<1x128x64xf32, #tpu.memory_space<vmem>>, %arg4: memref<1x128x64xf32, #tpu.memory_space<vmem>>, %arg5: memref<1x128x128xf32, #tpu.memory_space<vmem>>, %arg6: memref<1x128x64xf32, #tpu.memory_space<vmem>>, %arg7: memref<1x128x128xf32, #tpu.memory_space<vmem>>) attributes {dimension_semantics = [#tpu.dimension_semantics<parallel>, #tpu.dimension_semantics<parallel>], iteration_bounds = array<i64: 4, 1>, scalar_prefetch = 0 : i64, scratch_operands = 0 : i64, tpu.core_type = #tpu.core_type<tc>, window_params = [{transform_indices = @transform_0, window_bounds = array<i64: 1, 128, 64>}, {transform_indices = @transform_1, window_bounds = array<i64: 1, 128, 64>}, {transform_indices = @transform_2, window_bounds = array<i64: 1, 128, 64>}, {transform_indices = @transform_3, window_bounds = array<i64: 1, 128, 128>}, {transform_indices = @transform_4, window_bounds = array<i64: 1, 128, 64>}, {transform_indices = @transform_5, window_bounds = array<i64: 1, 128, 128>}]} {
    %c0 = arith.constant 0 : index
    %c0_0 = arith.constant 0 : index
    %c0_1 = arith.constant 0 : index
    %0 = vector.load %arg2[%c0, %c0_0, %c0_1] : memref<1x128x64xf32, #tpu.memory_space<vmem>>, vector<1x128x64xf32>
    %1 = vector.shape_cast %0 : vector<1x128x64xf32> to vector<128x64xf32>
    %cst = arith.constant 1.250000e-01 : f32
    %2 = vector.broadcast %cst : f32 to vector<128x64xf32>
    %3 = arith.mulf %1, %2 : vector<128x64xf32>
    %c0_2 = arith.constant 0 : index
    %c0_3 = arith.constant 0 : index
    %c0_4 = arith.constant 0 : index
    %4 = vector.load %arg3[%c0_2, %c0_3, %c0_4] : memref<1x128x64xf32, #tpu.memory_space<vmem>>, vector<1x128x64xf32>
    %5 = vector.shape_cast %4 : vector<1x128x64xf32> to vector<128x64xf32>
    %c0_5 = arith.constant 0 : index
    %c0_6 = arith.constant 0 : index
    %c0_7 = arith.constant 0 : index
    %6 = vector.load %arg4[%c0_5, %c0_6, %c0_7] : memref<1x128x64xf32, #tpu.memory_space<vmem>>, vector<1x128x64xf32>
    %7 = vector.shape_cast %6 : vector<1x128x64xf32> to vector<128x64xf32>
    %c0_8 = arith.constant 0 : index
    %c0_9 = arith.constant 0 : index
    %c0_10 = arith.constant 0 : index
    %8 = vector.load %arg5[%c0_8, %c0_9, %c0_10] : memref<1x128x128xf32, #tpu.memory_space<vmem>>, vector<1x128x128xf32>
    %9 = vector.shape_cast %8 : vector<1x128x128xf32> to vector<128x128xf32>
    %cst_11 = arith.constant dense<0.000000e+00> : vector<128x128xf32>
    %10 = tpu.matmul %3, %5, %cst_11 {dimension_numbers = #tpu.dot_dimension_numbers<[1], [1], [0], [0], [0, 0, 1, 0], [], []>} : vector<128x64xf32>, vector<128x64xf32>, vector<128x128xf32> -> vector<128x128xf32>
    %11 = arith.mulf %10, %9 : vector<128x128xf32>
    %cst_12 = arith.constant dense<0xFF800000> : vector<128xf32>
    %12 = vector.multi_reduction <maximumf>, %11, %cst_12 [1] : vector<128x128xf32> to vector<128xf32>
    %13 = vector.shape_cast %12 : vector<128xf32> to vector<128x1xf32>
    %14 = vector.broadcast %13 : vector<128x1xf32> to vector<128x128xf32>
    %15 = arith.subf %11, %14 : vector<128x128xf32>
    %16 = math.exp %15 : vector<128x128xf32>
    %cst_13 = arith.constant dense<0.000000e+00> : vector<128xf32>
    %17 = vector.multi_reduction <add>, %16, %cst_13 [1] : vector<128x128xf32> to vector<128xf32>
    %18 = vector.shape_cast %17 : vector<128xf32> to vector<128x1xf32>
    %19 = vector.broadcast %18 : vector<128x1xf32> to vector<128x128xf32>
    %20 = arith.divf %16, %19 : vector<128x128xf32>
    %21 = arith.mulf %20, %9 : vector<128x128xf32>
    %cst_14 = arith.constant dense<0.000000e+00> : vector<128xf32>
    %22 = vector.multi_reduction <add>, %21, %cst_14 [1] : vector<128x128xf32> to vector<128xf32>
    %23 = vector.shape_cast %22 : vector<128xf32> to vector<128x1xf32>
    %cst_15 = arith.constant 9.99999982E-14 : f32
    %24 = vector.broadcast %cst_15 : f32 to vector<128x1xf32>
    %25 = arith.addf %23, %24 : vector<128x1xf32>
    %26 = vector.broadcast %25 : vector<128x1xf32> to vector<128x128xf32>
    %27 = arith.divf %21, %26 : vector<128x128xf32>
    %c0_16 = arith.constant 0 : index
    %c0_17 = arith.constant 0 : index
    %c0_18 = arith.constant 0 : index
    %28 = vector.load %arg7[%c0_16, %c0_17, %c0_18] : memref<1x128x128xf32, #tpu.memory_space<vmem>>, vector<1x128x128xf32>
    %29 = vector.shape_cast %28 : vector<1x128x128xf32> to vector<128x128xf32>
    %30 = vector.shape_cast %27 : vector<128x128xf32> to vector<1x128x128xf32>
    tpu.vector_store %arg7[%c0_16, %c0_17, %c0_18], %30 {strides = array<i32>} : memref<1x128x128xf32, #tpu.memory_space<vmem>>, vector<1x128x128xf32>,
    %cst_19 = arith.constant dense<0.000000e+00> : vector<128x64xf32>
    %31 = tpu.matmul %27, %7, %cst_19 {dimension_numbers = #tpu.dot_dimension_numbers<[1], [0], [0], [1], [0, 0, 1, 1], [], []>} : vector<128x128xf32>, vector<128x64xf32>, vector<128x64xf32> -> vector<128x64xf32>
    %c0_20 = arith.constant 0 : index
    %c0_21 = arith.constant 0 : index
    %c0_22 = arith.constant 0 : index
    %32 = vector.load %arg6[%c0_20, %c0_21, %c0_22] : memref<1x128x64xf32, #tpu.memory_space<vmem>>, vector<1x128x64xf32>
    %33 = vector.shape_cast %32 : vector<1x128x64xf32> to vector<128x64xf32>
    %34 = vector.shape_cast %31 : vector<128x64xf32> to vector<1x128x64xf32>
    tpu.vector_store %arg6[%c0_20, %c0_21, %c0_22], %34 {strides = array<i32>} : memref<1x128x64xf32, #tpu.memory_space<vmem>>, vector<1x128x64xf32>,
    return
  }
  func.func @transform_0(%arg0: i32, %arg1: i32) -> (i32, i32, i32) {
    %c0_i32 = arith.constant 0 : i32
    %c0_i32_0 = arith.constant 0 : i32
    return %arg0, %arg1, %c0_i32 : i32, i32, i32
  }
  func.func @transform_1(%arg0: i32, %arg1: i32) -> (i32, i32, i32) {
    %c0_i32 = arith.constant 0 : i32
    %c0_i32_0 = arith.constant 0 : i32
    %c0_i32_1 = arith.constant 0 : i32
    return %arg0, %c0_i32, %c0_i32_0 : i32, i32, i32
  }
  func.func @transform_2(%arg0: i32, %arg1: i32) -> (i32, i32, i32) {
    %c0_i32 = arith.constant 0 : i32
    %c0_i32_0 = arith.constant 0 : i32
    %c0_i32_1 = arith.constant 0 : i32
    return %arg0, %c0_i32, %c0_i32_0 : i32, i32, i32
  }
  func.func @transform_3(%arg0: i32, %arg1: i32) -> (i32, i32, i32) {
    %c0_i32 = arith.constant 0 : i32
    %c0_i32_0 = arith.constant 0 : i32
    return %arg0, %arg1, %c0_i32 : i32, i32, i32
  }
  func.func @transform_4(%arg0: i32, %arg1: i32) -> (i32, i32, i32) {
    %c0_i32 = arith.constant 0 : i32
    %c0_i32_0 = arith.constant 0 : i32
    return %arg0, %arg1, %c0_i32 : i32, i32, i32
  }
  func.func @transform_5(%arg0: i32, %arg1: i32) -> (i32, i32, i32) {
    %c0_i32 = arith.constant 0 : i32
    %c0_i32_0 = arith.constant 0 : i32
    return %arg0, %arg1, %c0_i32 : i32, i32, i32
  }
}

</mosaic_0001>

<llo_original>
// kernel: tpu_custom_call.1
$region0: #{tpu_custom_call.1}
  #allocation0 [shape = 'u32[]', space=smem, size = 0x4, offset = 0x4, fixed_abs, tag = 'smem constant byte address 0x4 - core index']
  #allocation1 [shape = 'u32[72,128]{1,0:T(1,128)}', space=vmem, size = 0x9000, scoped, tag = 'internal scratch']
  %s0 = inlined_call_operand.vmem [shape: f32[4,128,64], index: 0, kind: input, shape index: {}]
  %s1 = inlined_call_operand.vmem [shape: f32[4,128,64], index: 1, kind: input, shape index: {}]
  %s2 = inlined_call_operand.vmem [shape: f32[4,128,64], index: 2, kind: input, shape index: {}]
  %s3 = inlined_call_operand.vmem [shape: f32[4,128,128], index: 3, kind: input, shape index: {}]
  %s4 = inlined_call_operand.vmem [shape: f32[4,128,64], index: 4, kind: output, shape index: {0}]
  %s5 = inlined_call_operand.hbm [shape: f32[4,128,128], index: 5, kind: output, shape index: {1}]
  %6 = xla_tuple %s4, %s5
  %s7 = sld [smem:[#allocation0]]
  $region57: #{tpu_custom_call.1} parent=0
    _
  %s9 = ssub.s32 1, %s7
  %s10 = scalar_select 0, %s9, %s7
  $region1: #{tpu_custom_call.1} parent=0
    #allocation2 [shape = 'u8[131072]{0}', space=vmem, size = 0x20000, scoped, tag = 'output window, operand 1']
    #allocation3 [shape = 's32[2]{0}', space=sflag, size = 0x8, scoped, tag = 'scoped memory for tpu_custom_call.1']
    %11 = vsyncpa [#allocation3], 0
    %s12 = scalar_lea.sflag [#allocation3], 1
    %13 = vsyncpa %s12, 0
    loop: start=0, step=1, limit=6
    $region2: #{tpu_custom_call.1} parent=1 // loop_pre_header
      _
    $region3: #{tpu_custom_call.1} parent=1 // loop_header
      %s15 = sphi 0, %s19
      %p16 = scmp.ge.s32.totalorder %s15, 6
      %s22 = sphi 0, %s34
      %s23 = sphi 0, %s30
      %s24 = sphi 0, %s22
      %s25 = sphi 0, %s23
      %s26 = sphi 0, %s24
      %s27 = sphi 0, %s25
      %s39 = sphi 0, %s41
      %s42 = sphi 0, %s39
      %s43 = sphi 0, %s42
      %s59 = sphi 0, %s43
      %s65 = sphi 0, %s67
      %s68 = sphi 0, %s65
      %s69 = sphi 0, %s68
      %s85 = sphi 0, %s69
      %s91 = sphi 0, %s93
      %s94 = sphi 0, %s91
      %s95 = sphi 0, %s94
      %s111 = sphi 0, %s95
      %s119 = sphi 0, %s121
      %s122 = sphi 0, %s119
      %s123 = sphi 0, %s122
      %s139 = sphi 0, %s123
      %s147 = sphi 0, %s149
      %s150 = sphi 0, %s147
      %s151 = sphi 0, %s150
      %s167 = sphi 0, %s151
      %s175 = sphi 0, %s177
      %s178 = sphi 0, %s175
      %s179 = sphi 0, %s178
      %s195 = sphi 0, %s179
    $region4: #{tpu_custom_call.1} parent=1 // loop_header_branch
      %18 = sbr.rel (%p16) target = $region8
    $region5: #{tpu_custom_call.1} parent=1 // loop_body
      %s20 = ssub.s32 %s15, 1
      %s21 = ssub.s32 %s15, 2
      %s28 = sadd.s32 1, %s23
      %p29 = scmp.ge.s32.totalorder %s28, 1
      %s30 = scalar_select %p29, 0, %s28
      %s31 = sadd.s32 1, %s22
      %s32 = scalar_select %p29, %s31, %s22
      %p33 = scmp.ge.s32.totalorder %s32, 4
      %s34 = scalar_select %p33, 0, %s32
      %s35 = ssub.s32 %s22, %s34
      %s36 = ssub.s32 %s23, %s30
      %s37 = sor.u32 %s35, %s36
      %p38 = scmp.eq.s32.totalorder %s37, 0
      %s40 = sadd.s32 %s39, 1
      %s41 = scalar_select %p38, %s39, %s40
      %p44 = pneg %p38
      %p45 = scmp.eq.s32.totalorder %s15, 3
      %p46 = por %p44, %p45
      %p47 = scmp.ne.s32.totalorder %s39, %s42
      %p48 = scmp.eq.s32.totalorder %s15, 0
      %p49 = por %p47, %p48
      %p50 = scmp.ne.s32.totalorder %s39, %s42
      %p51 = scmp.eq.s32.totalorder %s20, 3
      %p52 = por %p50, %p51
      %p53 = scmp.ne.s32.totalorder %s42, %s43
      %p54 = scmp.eq.s32.totalorder %s20, 0
      %p55 = por %p53, %p54
      %p56 = scmp.ne.s32.totalorder %s42, %s43
      %p57 = scmp.eq.s32.totalorder %s21, 3
      %p58 = por %p56, %p57
      %p60 = scmp.ne.s32.totalorder %s43, %s59
      %p61 = scmp.eq.s32.totalorder %s21, 0
      %p62 = por %p60, %p61
      %s63 = ssub.s32 %s22, %s34
      %p64 = scmp.eq.s32.totalorder %s63, 0
      %s66 = sadd.s32 %s65, 1
      %s67 = scalar_select %p64, %s65, %s66
      %p70 = pneg %p64
      %p71 = scmp.eq.s32.totalorder %s15, 3
      %p72 = por %p70, %p71
      %p73 = scmp.ne.s32.totalorder %s65, %s68
      %p74 = scmp.eq.s32.totalorder %s15, 0
      %p75 = por %p73, %p74
      %p76 = scmp.ne.s32.totalorder %s65, %s68
      %p77 = scmp.eq.s32.totalorder %s20, 3
      %p78 = por %p76, %p77
      %p79 = scmp.ne.s32.totalorder %s68, %s69
      %p80 = scmp.eq.s32.totalorder %s20, 0
      %p81 = por %p79, %p80
      %p82 = scmp.ne.s32.totalorder %s68, %s69
      %p83 = scmp.eq.s32.totalorder %s21, 3
      %p84 = por %p82, %p83
      %p86 = scmp.ne.s32.totalorder %s69, %s85
      %p87 = scmp.eq.s32.totalorder %s21, 0
      %p88 = por %p86, %p87
      %s89 = ssub.s32 %s22, %s34
      %p90 = scmp.eq.s32.totalorder %s89, 0
      %s92 = sadd.s32 %s91, 1
      %s93 = scalar_select %p90, %s91, %s92
      %p96 = pneg %p90
      %p97 = scmp.eq.s32.totalorder %s15, 3
      %p98 = por %p96, %p97
      %p99 = scmp.ne.s32.totalorder %s91, %s94
      %p100 = scmp.eq.s32.totalorder %s15, 0
      %p101 = por %p99, %p100
      %p102 = scmp.ne.s32.totalorder %s91, %s94
      %p103 = scmp.eq.s32.totalorder %s20, 3
      %p104 = por %p102, %p103
      %p105 = scmp.ne.s32.totalorder %s94, %s95
      %p106 = scmp.eq.s32.totalorder %s20, 0
      %p107 = por %p105, %p106
      %p108 = scmp.ne.s32.totalorder %s94, %s95
      %p109 = scmp.eq.s32.totalorder %s21, 3
      %p110 = por %p108, %p109
      %p112 = scmp.ne.s32.totalorder %s95, %s111
      %p113 = scmp.eq.s32.totalorder %s21, 0
      %p114 = por %p112, %p113
      %s115 = ssub.s32 %s22, %s34
      %s116 = ssub.s32 %s23, %s30
      %s117 = sor.u32 %s115, %s116
      %p118 = scmp.eq.s32.totalorder %s117, 0
      %s120 = sadd.s32 %s119, 1
      %s121 = scalar_select %p118, %s119, %s120
      %p124 = pneg %p118
      %p125 = scmp.eq.s32.totalorder %s15, 3
      %p126 = por %p124, %p125
      %p127 = scmp.ne.s32.totalorder %s119, %s122
      %p128 = scmp.eq.s32.totalorder %s15, 0
      %p129 = por %p127, %p128
      %p130 = scmp.ne.s32.totalorder %s119, %s122
      %p131 = scmp.eq.s32.totalorder %s20, 3
      %p132 = por %p130, %p131
      %p133 = scmp.ne.s32.totalorder %s122, %s123
      %p134 = scmp.eq.s32.totalorder %s20, 0
      %p135 = por %p133, %p134
      %p136 = scmp.ne.s32.totalorder %s122, %s123
      %p137 = scmp.eq.s32.totalorder %s21, 3
      %p138 = por %p136, %p137
      %p140 = scmp.ne.s32.totalorder %s123, %s139
      %p141 = scmp.eq.s32.totalorder %s21, 0
      %p142 = por %p140, %p141
      %s143 = ssub.s32 %s22, %s34
      %s144 = ssub.s32 %s23, %s30
      %s145 = sor.u32 %s143, %s144
      %p146 = scmp.eq.s32.totalorder %s145, 0
      %s148 = sadd.s32 %s147, 1
      %s149 = scalar_select %p146, %s147, %s148
      %p152 = pneg %p146
      %p153 = scmp.eq.s32.totalorder %s15, 3
      %p154 = por %p152, %p153
      %p155 = scmp.ne.s32.totalorder %s147, %s150
      %p156 = scmp.eq.s32.totalorder %s15, 0
      %p157 = por %p155, %p156
      %p158 = scmp.ne.s32.totalorder %s147, %s150
      %p159 = scmp.eq.s32.totalorder %s20, 3
      %p160 = por %p158, %p159
      %p161 = scmp.ne.s32.totalorder %s150, %s151
      %p162 = scmp.eq.s32.totalorder %s20, 0
      %p163 = por %p161, %p162
      %p164 = scmp.ne.s32.totalorder %s150, %s151
      %p165 = scmp.eq.s32.totalorder %s21, 3
      %p166 = por %p164, %p165
      %p168 = scmp.ne.s32.totalorder %s151, %s167
      %p169 = scmp.eq.s32.totalorder %s21, 0
      %p170 = por %p168, %p169
      %s171 = ssub.s32 %s22, %s34
      %s172 = ssub.s32 %s23, %s30
      %s173 = sor.u32 %s171, %s172
      %p174 = scmp.eq.s32.totalorder %s173, 0
      %s176 = sadd.s32 %s175, 1
      %s177 = scalar_select %p174, %s175, %s176
      %p180 = pneg %p174
      %p181 = scmp.eq.s32.totalorder %s15, 3
      %p182 = por %p180, %p181
      %p183 = scmp.ne.s32.totalorder %s175, %s178
      %p184 = scmp.eq.s32.totalorder %s15, 0
      %p185 = por %p183, %p184
      %p186 = scmp.ne.s32.totalorder %s175, %s178
      %p187 = scmp.eq.s32.totalorder %s20, 3
      %p188 = por %p186, %p187
      %p189 = scmp.ne.s32.totalorder %s178, %s179
      %p190 = scmp.eq.s32.totalorder %s20, 0
      %p191 = por %p189, %p190
      %p192 = scmp.ne.s32.totalorder %s178, %s179
      %p193 = scmp.eq.s32.totalorder %s21, 3
      %p194 = por %p192, %p193
      %p196 = scmp.ne.s32.totalorder %s179, %s195
      %p197 = scmp.eq.s32.totalorder %s21, 0
      %p198 = por %p196, %p197
      %p199 = scmp.le.s32.totalorder 1, %s15
      %p200 = scmp.lt.s32.totalorder %s15, 5
      %p201 = pnand %p199, %p200
      %p202 = pneg %p201
      // Predicated region
      $region9: #{tpu_custom_call.1} parent=5 // pred_check
        _
      $region10: #{tpu_custom_call.1} parent=5 // pred_check_branch
        %204 = sbr.rel (%p201) target = $region12
      $region11: #{tpu_custom_call.1} parent=5 // pred_region
        %s205 = ssub.s32 %s15, 1
      $region12: #{tpu_custom_call.1} parent=5 // pred_fallthru
        _
      %p206 = scmp.lt.s32.totalorder %s15, 4
      // Predicated region
      $region13: #{tpu_custom_call.1} parent=5 // pred_check
        %p207 = pneg %p206
      $region14: #{tpu_custom_call.1} parent=5 // pred_check_branch
        %209 = sbr.rel (%p207) target = $region16
      $region15: #{tpu_custom_call.1} parent=5 // pred_region
        // Predicated region
        $region17: #{tpu_custom_call.1} parent=15 // pred_check
          %p210 = pneg %p49
        $region18: #{tpu_custom_call.1} parent=15 // pred_check_branch
          %212 = sbr.rel (%p210) target = $region20
        $region19: #{tpu_custom_call.1} parent=15 // pred_region
          %s213 = smul.u32 16, %s23
          %p214 = scmp.lt.s32.totalorder %s22, 3
          %s215 = scalar_select %p214, %s22, 3
          %p216 = scmp.lt.s32.totalorder %s213, 15
          %s217 = scalar_select %p216, %s213, 15
          %s218 = smul.addr %s215, 16
          %s219 = sadd.s32 %s217, %s218
          %s220 = smul.addr %s219, 8
          %s221 = scalar_lea.vmem %s0, %s220
          %s222 = smul.u32 16, %s23
        $region20: #{tpu_custom_call.1} parent=15 // pred_fallthru
          _
        // Predicated region
        $region21: #{tpu_custom_call.1} parent=15 // pred_check
          %p223 = pneg %p75
        $region22: #{tpu_custom_call.1} parent=15 // pred_check_branch
          %225 = sbr.rel (%p223) target = $region24
        $region23: #{tpu_custom_call.1} parent=15 // pred_region
          %p226 = scmp.lt.s32.totalorder %s22, 3
          %s227 = scalar_select %p226, %s22, 3
          %s228 = smul.addr %s227, 16
          %s229 = smul.addr %s228, 8
          %s230 = scalar_lea.vmem %s1, %s229
        $region24: #{tpu_custom_call.1} parent=15 // pred_fallthru
          _
        // Predicated region
        $region25: #{tpu_custom_call.1} parent=15 // pred_check
          %p231 = pneg %p101
        $region26: #{tpu_custom_call.1} parent=15 // pred_check_branch
          %233 = sbr.rel (%p231) target = $region28
        $region27: #{tpu_custom_call.1} parent=15 // pred_region
          %p234 = scmp.lt.s32.totalorder %s22, 3
          %s235 = scalar_select %p234, %s22, 3
          %s236 = smul.addr %s235, 16
          %s237 = smul.addr %s236, 8
          %s238 = scalar_lea.vmem %s2, %s237
        $region28: #{tpu_custom_call.1} parent=15 // pred_fallthru
          _
        // Predicated region
        $region29: #{tpu_custom_call.1} parent=15 // pred_check
          %p239 = pneg %p129
        $region30: #{tpu_custom_call.1} parent=15 // pred_check_branch
          %241 = sbr.rel (%p239) target = $region32
        $region31: #{tpu_custom_call.1} parent=15 // pred_region
          %s242 = smul.u32 16, %s23
          %p243 = scmp.lt.s32.totalorder %s22, 3
          %s244 = scalar_select %p243, %s22, 3
          %p245 = scmp.lt.s32.totalorder %s242, 15
          %s246 = scalar_select %p245, %s242, 15
          %s247 = smul.addr %s244, 16
          %s248 = sadd.s32 %s246, %s247
          %s249 = smul.addr %s248, 8
          %s250 = scalar_lea.vmem %s3, %s249
          %s251 = smul.u32 16, %s23
        $region32: #{tpu_custom_call.1} parent=15 // pred_fallthru
          _
      $region16: #{tpu_custom_call.1} parent=5 // pred_fallthru
        _
      %p252 = scmp.le.s32.totalorder 1, %s15
      %p253 = scmp.lt.s32.totalorder %s15, 5
      %p254 = pnand %p252, %p253
      %p255 = pneg %p254
      // Predicated region
      $region33: #{tpu_custom_call.1} parent=5 // pred_check
        _
      $region34: #{tpu_custom_call.1} parent=5 // pred_check_branch
        %257 = sbr.rel (%p254) target = $region36
      $region35: #{tpu_custom_call.1} parent=5 // pred_region
        %s258 = ssub.s32 %s15, 1
        %s259 = smul.u32 16, %s25
        %p260 = scmp.lt.s32.totalorder %s24, 3
        %s261 = scalar_select %p260, %s24, 3
        %p262 = scmp.lt.s32.totalorder %s259, 15
        %s263 = scalar_select %p262, %s259, 15
        %s264 = smul.addr %s261, 16
        %s265 = sadd.s32 %s263, %s264
        %s266 = smul.addr %s265, 8
        %s267 = scalar_lea.vmem %s0, %s266
        %p268 = pneg %p55
        %p269 = pneg %p52
        %p270 = scmp.lt.s32.totalorder %s24, 3
        %s271 = scalar_select %p270, %s24, 3
        %s272 = smul.addr %s271, 16
        %s273 = smul.addr %s272, 8
        %s274 = scalar_lea.vmem %s1, %s273
        %p275 = pneg %p81
        %p276 = pneg %p78
        %p277 = scmp.lt.s32.totalorder %s24, 3
        %s278 = scalar_select %p277, %s24, 3
        %s279 = smul.addr %s278, 16
        %s280 = smul.addr %s279, 8
        %s281 = scalar_lea.vmem %s2, %s280
        %p282 = pneg %p107
        %p283 = pneg %p104
        %s284 = smul.u32 16, %s25
        %p285 = scmp.lt.s32.totalorder %s24, 3
        %s286 = scalar_select %p285, %s24, 3
        %p287 = scmp.lt.s32.totalorder %s284, 15
        %s288 = scalar_select %p287, %s284, 15
        %s289 = smul.addr %s286, 16
        %s290 = sadd.s32 %s288, %s289
        %s291 = smul.addr %s290, 8
        %s292 = scalar_lea.vmem %s3, %s291
        %p293 = pneg %p135
        %p294 = pneg %p132
        %p295 = pneg %p163
        %p296 = pneg %p160
        %s297 = smul.u32 16, %s25
        %p298 = scmp.lt.s32.totalorder %s24, 3
        %s299 = scalar_select %p298, %s24, 3
        %p300 = scmp.lt.s32.totalorder %s297, 15
        %s301 = scalar_select %p300, %s297, 15
        %s302 = smul.addr %s299, 16
        %s303 = sadd.s32 %s301, %s302
        %s304 = smul.addr %s303, 8
        %s305 = scalar_lea.vmem %s4, %s304
        %p306 = pneg %p191
        %p307 = pneg %p188
        %s308 = sand.u32 %s178, 1
        %s309 = scalar_lea.sflag [#allocation3], %s308
        %s310 = sand.u32 %s178, 1
        %s311 = smul.addr %s310, 128
        %s312 = scalar_lea.vmem [#allocation2], %s311
        %s313 = smul.u32 16, %s25
        %p314 = scmp.lt.s32.totalorder %s24, 3
        %s315 = scalar_select %p314, %s24, 3
        %p316 = scmp.lt.s32.totalorder %s313, 15
        %s317 = scalar_select %p316, %s313, 15
        %s318 = smul.addr %s315, 16
        %s319 = sadd.s32 %s317, %s318
        %s320 = smul.addr %s319, 8
        %s321 = scalar_lea.vmem %s0, %s320
        %s322 = smul.u32 16, %s25
        %p323 = scmp.lt.s32.totalorder %s24, 3
        %s324 = scalar_select %p323, %s24, 3
        %s325 = smul.addr %s324, 16
        %s326 = smul.addr %s325, 8
        %s327 = scalar_lea.vmem %s1, %s326
        %p328 = scmp.lt.s32.totalorder %s24, 3
        %s329 = scalar_select %p328, %s24, 3
        %s330 = smul.addr %s329, 16
        %s331 = smul.addr %s330, 8
        %s332 = scalar_lea.vmem %s2, %s331
        %s333 = smul.u32 16, %s25
        %p334 = scmp.lt.s32.totalorder %s24, 3
        %s335 = scalar_select %p334, %s24, 3
        %p336 = scmp.lt.s32.totalorder %s333, 15
        %s337 = scalar_select %p336, %s333, 15
        %s338 = smul.addr %s335, 16
        %s339 = sadd.s32 %s337, %s338
        %s340 = smul.addr %s339, 8
        %s341 = scalar_lea.vmem %s3, %s340
        %s342 = smul.u32 16, %s25
        %s343 = smul.u32 16, %s25
        %p344 = scmp.lt.s32.totalorder %s24, 3
        %s345 = scalar_select %p344, %s24, 3
        %p346 = scmp.lt.s32.totalorder %s343, 15
        %s347 = scalar_select %p346, %s343, 15
        %s348 = smul.addr %s345, 16
        %s349 = sadd.s32 %s347, %s348
        %s350 = smul.addr %s349, 8
        %s351 = scalar_lea.vmem %s4, %s350
        %s352 = smul.u32 16, %s25
        %s353 = smul.u32 16, %s25
        %v354 = vld [vmem:[%s321] sm:$0xff]
        %v355 = vld [vmem:[%s321 + $0x8] sm:$0xff]
        %v356 = vld [vmem:[%s321 + $0x10] sm:$0xff]
        %v357 = vld [vmem:[%s321 + $0x18] sm:$0xff]
        %v358 = vld [vmem:[%s321 + $0x20] sm:$0xff]
        %v359 = vld [vmem:[%s321 + $0x28] sm:$0xff]
        %v360 = vld [vmem:[%s321 + $0x30] sm:$0xff]
        %v361 = vld [vmem:[%s321 + $0x38] sm:$0xff]
        %v362 = vld [vmem:[%s321 + $0x40] sm:$0xff]
        %v363 = vld [vmem:[%s321 + $0x48] sm:$0xff]
        %v364 = vld [vmem:[%s321 + $0x50] sm:$0xff]
        %v365 = vld [vmem:[%s321 + $0x58] sm:$0xff]
        %v366 = vld [vmem:[%s321 + $0x60] sm:$0xff]
        %v367 = vld [vmem:[%s321 + $0x68] sm:$0xff]
        %v368 = vld [vmem:[%s321 + $0x70] sm:$0xff]
        %v369 = vld [vmem:[%s321 + $0x78] sm:$0xff]
        %v370 = vmul.f32 %v354, 0.125
        %v371 = vmul.f32 %v355, 0.125
        %v372 = vmul.f32 %v356, 0.125
        %v373 = vmul.f32 %v357, 0.125
        %v374 = vmul.f32 %v358, 0.125
        %v375 = vmul.f32 %v359, 0.125
        %v376 = vmul.f32 %v360, 0.125
        %v377 = vmul.f32 %v361, 0.125
        %v378 = vmul.f32 %v362, 0.125
        %v379 = vmul.f32 %v363, 0.125
        %v380 = vmul.f32 %v364, 0.125
        %v381 = vmul.f32 %v365, 0.125
        %v382 = vmul.f32 %v366, 0.125
        %v383 = vmul.f32 %v367, 0.125
        %v384 = vmul.f32 %v368, 0.125
        %v385 = vmul.f32 %v369, 0.125
        %v386 = vld [vmem:[%s327] sm:$0xff]
        %v387 = vld [vmem:[%s327 + $0x8] sm:$0xff]
        %v388 = vld [vmem:[%s327 + $0x10] sm:$0xff]
        %v389 = vld [vmem:[%s327 + $0x18] sm:$0xff]
        %v390 = vld [vmem:[%s327 + $0x20] sm:$0xff]
        %v391 = vld [vmem:[%s327 + $0x28] sm:$0xff]
        %v392 = vld [vmem:[%s327 + $0x30] sm:$0xff]
        %v393 = vld [vmem:[%s327 + $0x38] sm:$0xff]
        %v394 = vld [vmem:[%s327 + $0x40] sm:$0xff]
        %v395 = vld [vmem:[%s327 + $0x48] sm:$0xff]
        %v396 = vld [vmem:[%s327 + $0x50] sm:$0xff]
        %v397 = vld [vmem:[%s327 + $0x58] sm:$0xff]
        %v398 = vld [vmem:[%s327 + $0x60] sm:$0xff]
        %v399 = vld [vmem:[%s327 + $0x68] sm:$0xff]
        %v400 = vld [vmem:[%s327 + $0x70] sm:$0xff]
        %v401 = vld [vmem:[%s327 + $0x78] sm:$0xff]
        %v402 = vld [vmem:[%s332] sm:$0xff]
        %v403 = vld [vmem:[%s332 + $0x8] sm:$0xff]
        %v404 = vld [vmem:[%s332 + $0x10] sm:$0xff]
        %v405 = vld [vmem:[%s332 + $0x18] sm:$0xff]
        %v406 = vld [vmem:[%s332 + $0x20] sm:$0xff]
        %v407 = vld [vmem:[%s332 + $0x28] sm:$0xff]
        %v408 = vld [vmem:[%s332 + $0x30] sm:$0xff]
        %v409 = vld [vmem:[%s332 + $0x38] sm:$0xff]
        %v410 = vld [vmem:[%s332 + $0x40] sm:$0xff]
        %v411 = vld [vmem:[%s332 + $0x48] sm:$0xff]
        %v412 = vld [vmem:[%s332 + $0x50] sm:$0xff]
        %v413 = vld [vmem:[%s332 + $0x58] sm:$0xff]
        %v414 = vld [vmem:[%s332 + $0x60] sm:$0xff]
        %v415 = vld [vmem:[%s332 + $0x68] sm:$0xff]
        %v416 = vld [vmem:[%s332 + $0x70] sm:$0xff]
        %v417 = vld [vmem:[%s332 + $0x78] sm:$0xff]
        %v418 = vld [vmem:[%s341] sm:$0xff]
        %v419 = vld [vmem:[%s341 + $0x8] sm:$0xff]
        %v420 = vld [vmem:[%s341 + $0x10] sm:$0xff]
        %v421 = vld [vmem:[%s341 + $0x18] sm:$0xff]
        %v422 = vld [vmem:[%s341 + $0x20] sm:$0xff]
        %v423 = vld [vmem:[%s341 + $0x28] sm:$0xff]
        %v424 = vld [vmem:[%s341 + $0x30] sm:$0xff]
        %v425 = vld [vmem:[%s341 + $0x38] sm:$0xff]
        %v426 = vld [vmem:[%s341 + $0x40] sm:$0xff]
        %v427 = vld [vmem:[%s341 + $0x48] sm:$0xff]
        %v428 = vld [vmem:[%s341 + $0x50] sm:$0xff]
        %v429 = vld [vmem:[%s341 + $0x58] sm:$0xff]
        %v430 = vld [vmem:[%s341 + $0x60] sm:$0xff]
        %v431 = vld [vmem:[%s341 + $0x68] sm:$0xff]
        %v432 = vld [vmem:[%s341 + $0x70] sm:$0xff]
        %v433 = vld [vmem:[%s341 + $0x78] sm:$0xff]
        %vm434 = vcmask 523264
        %v436 = vsel %vm434, %v370, 0
        %v439 = vsel %vm434, %v371, 0
        %v442 = vsel %vm434, %v372, 0
        %v445 = vsel %vm434, %v373, 0
        %v448 = vsel %vm434, %v374, 0
        %v451 = vsel %vm434, %v375, 0
        %v454 = vsel %vm434, %v376, 0
        %v457 = vsel %vm434, %v377, 0
        %v460 = vsel %vm434, %v378, 0
        %v463 = vsel %vm434, %v379, 0
        %v466 = vsel %vm434, %v380, 0
        %v469 = vsel %vm434, %v381, 0
        %v472 = vsel %vm434, %v382, 0
        %v475 = vsel %vm434, %v383, 0
        %v478 = vsel %vm434, %v384, 0
        %v481 = vsel %vm434, %v385, 0
        %v484 = vsel %vm434, %v386, 0
        %v487 = vsel %vm434, %v387, 0
        %v490 = vsel %vm434, %v388, 0
        %v493 = vsel %vm434, %v389, 0
        %v496 = vsel %vm434, %v390, 0
        %v499 = vsel %vm434, %v391, 0
        %v502 = vsel %vm434, %v392, 0
        %v505 = vsel %vm434, %v393, 0
        %v508 = vsel %vm434, %v394, 0
        %v511 = vsel %vm434, %v395, 0
        %v514 = vsel %vm434, %v396, 0
        %v517 = vsel %vm434, %v397, 0
        %v520 = vsel %vm434, %v398, 0
        %v523 = vsel %vm434, %v399, 0
        %v526 = vsel %vm434, %v400, 0
        %v529 = vsel %vm434, %v401, 0
        %531 = vmatpush.xpose.msra.mxu0 %v529
        %532 = vmatpush.xpose.msra.mxu0 %v526
        %533 = vmatpush.xpose.msra.mxu0 %v523
        %534 = vmatpush.xpose.msra.mxu0 %v520
        %535 = vmatpush.xpose.msra.mxu0 %v517
        %536 = vmatpush.xpose.msra.mxu0 %v514
        %537 = vmatpush.xpose.msra.mxu0 %v511
        %538 = vmatpush.xpose.msra.mxu0 %v508
        %539 = vmatpush.xpose.msra.mxu0 %v505
        %540 = vmatpush.xpose.msra.mxu0 %v502
        %541 = vmatpush.xpose.msra.mxu0 %v499
        %542 = vmatpush.xpose.msra.mxu0 %v496
        %543 = vmatpush.xpose.msra.mxu0 %v493
        %544 = vmatpush.xpose.msra.mxu0 %v490
        %545 = vmatpush.xpose.msra.mxu0 %v487
        %546 = vmatpush.xpose.msra.mxu0 %v484
        %547 = vmatmul.f32.gmra.mxu0 %v436
        %v548 = vpop.f32.mrf.mxu0
        %v549 = vadd.f32 0.0, %v548
        %550 = vmatmul.f32.gmra.mxu0 %v439
        %v551 = vpop.f32.mrf.mxu0
        %v552 = vadd.f32 0.0, %v551
        %553 = vmatmul.f32.gmra.mxu0 %v442
        %v554 = vpop.f32.mrf.mxu0
        %v555 = vadd.f32 0.0, %v554
        %556 = vmatmul.f32.gmra.mxu0 %v445
        %v557 = vpop.f32.mrf.mxu0
        %v558 = vadd.f32 0.0, %v557
        %559 = vmatmul.f32.gmra.mxu0 %v448
        %v560 = vpop.f32.mrf.mxu0
        %v561 = vadd.f32 0.0, %v560
        %562 = vmatmul.f32.gmra.mxu0 %v451
        %v563 = vpop.f32.mrf.mxu0
        %v564 = vadd.f32 0.0, %v563
        %565 = vmatmul.f32.gmra.mxu0 %v454
        %v566 = vpop.f32.mrf.mxu0
        %v567 = vadd.f32 0.0, %v566
        %568 = vmatmul.f32.gmra.mxu0 %v457
        %v569 = vpop.f32.mrf.mxu0
        %v570 = vadd.f32 0.0, %v569
        %571 = vmatmul.f32.gmra.mxu0 %v460
        %v572 = vpop.f32.mrf.mxu0
        %v573 = vadd.f32 0.0, %v572
        %574 = vmatmul.f32.gmra.mxu0 %v463
        %v575 = vpop.f32.mrf.mxu0
        %v576 = vadd.f32 0.0, %v575
        %577 = vmatmul.f32.gmra.mxu0 %v466
        %v578 = vpop.f32.mrf.mxu0
        %v579 = vadd.f32 0.0, %v578
        %580 = vmatmul.f32.gmra.mxu0 %v469
        %v581 = vpop.f32.mrf.mxu0
        %v582 = vadd.f32 0.0, %v581
        %583 = vmatmul.f32.gmra.mxu0 %v472
        %v584 = vpop.f32.mrf.mxu0
        %v585 = vadd.f32 0.0, %v584
        %586 = vmatmul.f32.gmra.mxu0 %v475
        %v587 = vpop.f32.mrf.mxu0
        %v588 = vadd.f32 0.0, %v587
        %589 = vmatmul.f32.gmra.mxu0 %v478
        %v590 = vpop.f32.mrf.mxu0
        %v591 = vadd.f32 0.0, %v590
        %592 = vmatmul.f32.gmra.mxu0 %v481
        %v593 = vpop.f32.mrf.mxu0
        %v594 = vadd.f32 0.0, %v593
        %595 = vdwg.mxu0
        %v596 = vmul.f32 %v549, %v418
        %v597 = vmul.f32 %v552, %v419
        %v598 = vmul.f32 %v555, %v420
        %v599 = vmul.f32 %v558, %v421
        %v600 = vmul.f32 %v561, %v422
        %v601 = vmul.f32 %v564, %v423
        %v602 = vmul.f32 %v567, %v424
        %v603 = vmul.f32 %v570, %v425
        %v604 = vmul.f32 %v573, %v426
        %v605 = vmul.f32 %v576, %v427
        %v606 = vmul.f32 %v579, %v428
        %v607 = vmul.f32 %v582, %v429
        %v608 = vmul.f32 %v585, %v430
        %v609 = vmul.f32 %v588, %v431
        %v610 = vmul.f32 %v591, %v432
        %v611 = vmul.f32 %v594, %v433
        %612 = vmax.xlane.f32.xlu0 %v596
        %v613 = vpop.xlane.xlu0 %612
        %614 = vmax.xlane.f32.xlu0 %v597
        %v615 = vpop.xlane.xlu0 %614
        %616 = vmax.xlane.f32.xlu0 %v598
        %v617 = vpop.xlane.xlu0 %616
        %618 = vmax.xlane.f32.xlu0 %v599
        %v619 = vpop.xlane.xlu0 %618
        %620 = vmax.xlane.f32.xlu0 %v600
        %v621 = vpop.xlane.xlu0 %620
        %622 = vmax.xlane.f32.xlu0 %v601
        %v623 = vpop.xlane.xlu0 %622
        %624 = vmax.xlane.f32.xlu0 %v602
        %v625 = vpop.xlane.xlu0 %624
        %626 = vmax.xlane.f32.xlu0 %v603
        %v627 = vpop.xlane.xlu0 %626
        %628 = vmax.xlane.f32.xlu0 %v604
        %v629 = vpop.xlane.xlu0 %628
        %630 = vmax.xlane.f32.xlu0 %v605
        %v631 = vpop.xlane.xlu0 %630
        %632 = vmax.xlane.f32.xlu0 %v606
        %v633 = vpop.xlane.xlu0 %632
        %634 = vmax.xlane.f32.xlu0 %v607
        %v635 = vpop.xlane.xlu0 %634
        %636 = vmax.xlane.f32.xlu0 %v608
        %v637 = vpop.xlane.xlu0 %636
        %638 = vmax.xlane.f32.xlu0 %v609
        %v639 = vpop.xlane.xlu0 %638
        %640 = vmax.xlane.f32.xlu0 %v610
        %v641 = vpop.xlane.xlu0 %640
        %642 = vmax.xlane.f32.xlu0 %v611
        %v643 = vpop.xlane.xlu0 %642
        %v644 = vsub.f32 %v596, %v613
        %v645 = vsub.f32 %v597, %v615
        %v646 = vsub.f32 %v598, %v617
        %v647 = vsub.f32 %v599, %v619
        %v648 = vsub.f32 %v600, %v621
        %v649 = vsub.f32 %v601, %v623
        %v650 = vsub.f32 %v602, %v625
        %v651 = vsub.f32 %v603, %v627
        %v652 = vsub.f32 %v604, %v629
        %v653 = vsub.f32 %v605, %v631
        %v654 = vsub.f32 %v606, %v633
        %v655 = vsub.f32 %v607, %v635
        %v656 = vsub.f32 %v608, %v637
        %v657 = vsub.f32 %v609, %v639
        %v658 = vsub.f32 %v610, %v641
        %v659 = vsub.f32 %v611, %v643
        %v660 = vmul.f32 %v644, 1.442695
        %v661 = vpow.pop %v660
        %v662 = vmul.f32 %v645, 1.442695
        %v663 = vpow.pop %v662
        %v664 = vmul.f32 %v646, 1.442695
        %v665 = vpow.pop %v664
        %v666 = vmul.f32 %v647, 1.442695
        %v667 = vpow.pop %v666
        %v668 = vmul.f32 %v648, 1.442695
        %v669 = vpow.pop %v668
        %v670 = vmul.f32 %v649, 1.442695
        %v671 = vpow.pop %v670
        %v672 = vmul.f32 %v650, 1.442695
        %v673 = vpow.pop %v672
        %v674 = vmul.f32 %v651, 1.442695
        %v675 = vpow.pop %v674
        %v676 = vmul.f32 %v652, 1.442695
        %v677 = vpow.pop %v676
        %v678 = vmul.f32 %v653, 1.442695
        %v679 = vpow.pop %v678
        %v680 = vmul.f32 %v654, 1.442695
        %v681 = vpow.pop %v680
        %v682 = vmul.f32 %v655, 1.442695
        %v683 = vpow.pop %v682
        %v684 = vmul.f32 %v656, 1.442695
        %v685 = vpow.pop %v684
        %v686 = vmul.f32 %v657, 1.442695
        %v687 = vpow.pop %v686
        %v688 = vmul.f32 %v658, 1.442695
        %v689 = vpow.pop %v688
        %v690 = vmul.f32 %v659, 1.442695
        %v691 = vpow.pop %v690
        %692 = vadd.xlane.f32.xlu0 %v661
        %v693 = vpop.xlane.xlu0 %692
        %694 = vadd.xlane.f32.xlu0 %v663
        %v695 = vpop.xlane.xlu0 %694
        %696 = vadd.xlane.f32.xlu0 %v665
        %v697 = vpop.xlane.xlu0 %696
        %698 = vadd.xlane.f32.xlu0 %v667
        %v699 = vpop.xlane.xlu0 %698
        %700 = vadd.xlane.f32.xlu0 %v669
        %v701 = vpop.xlane.xlu0 %700
        %702 = vadd.xlane.f32.xlu0 %v671
        %v703 = vpop.xlane.xlu0 %702
        %704 = vadd.xlane.f32.xlu0 %v673
        %v705 = vpop.xlane.xlu0 %704
        %706 = vadd.xlane.f32.xlu0 %v675
        %v707 = vpop.xlane.xlu0 %706
        %708 = vadd.xlane.f32.xlu0 %v677
        %v709 = vpop.xlane.xlu0 %708
        %710 = vadd.xlane.f32.xlu0 %v679
        %v711 = vpop.xlane.xlu0 %710
        %712 = vadd.xlane.f32.xlu0 %v681
        %v713 = vpop.xlane.xlu0 %712
        %714 = vadd.xlane.f32.xlu0 %v683
        %v715 = vpop.xlane.xlu0 %714
        %716 = vadd.xlane.f32.xlu0 %v685
        %v717 = vpop.xlane.xlu0 %716
        %718 = vadd.xlane.f32.xlu0 %v687
        %v719 = vpop.xlane.xlu0 %718
        %720 = vadd.xlane.f32.xlu0 %v689
        %v721 = vpop.xlane.xlu0 %720
        %722 = vadd.xlane.f32.xlu0 %v691
        %v723 = vpop.xlane.xlu0 %722
        %v724 = vrcp.pop %v693
        %v725 = vmul.f32 %v693, %v724
        %v726 = vsub.f32 1.0, %v725
        %v727 = vmul.f32 %v724, %v726
        %v728 = vadd.f32 %v724, %v727
        %vm729 = vweird.f32 %v693
        %vm730 = vweird.f32 %v724
        %vm731 = vmor %vm729, %vm730
        %v732 = vsel %vm731, %v724, %v728
        %v733 = vand.u32 2147483647, %v693
        %vm734 = vcmp.eq.f32.partialorder %v733, 8.507059e+37
        %v735 = vand.u32 %v693, 2147483648
        %v736 = vor.u32 1.1754944e-38, %v735
        %v737 = vsel %vm734, %v736, %v732
        %v738 = vmul.f32 %v661, %v737
        %v739 = vrcp.pop %v695
        %v740 = vmul.f32 %v695, %v739
        %v741 = vsub.f32 1.0, %v740
        %v742 = vmul.f32 %v739, %v741
        %v743 = vadd.f32 %v739, %v742
        %vm744 = vweird.f32 %v695
        %vm745 = vweird.f32 %v739
        %vm746 = vmor %vm744, %vm745
        %v747 = vsel %vm746, %v739, %v743
        %v748 = vand.u32 2147483647, %v695
        %vm749 = vcmp.eq.f32.partialorder %v748, 8.507059e+37
        %v750 = vand.u32 %v695, 2147483648
        %v751 = vor.u32 1.1754944e-38, %v750
        %v752 = vsel %vm749, %v751, %v747
        %v753 = vmul.f32 %v663, %v752
        %v754 = vrcp.pop %v697
        %v755 = vmul.f32 %v697, %v754
        %v756 = vsub.f32 1.0, %v755
        %v757 = vmul.f32 %v754, %v756
        %v758 = vadd.f32 %v754, %v757
        %vm759 = vweird.f32 %v697
        %vm760 = vweird.f32 %v754
        %vm761 = vmor %vm759, %vm760
        %v762 = vsel %vm761, %v754, %v758
        %v763 = vand.u32 2147483647, %v697
        %vm764 = vcmp.eq.f32.partialorder %v763, 8.507059e+37
        %v765 = vand.u32 %v697, 2147483648
        %v766 = vor.u32 1.1754944e-38, %v765
        %v767 = vsel %vm764, %v766, %v762
        %v768 = vmul.f32 %v665, %v767
        %v769 = vrcp.pop %v699
        %v770 = vmul.f32 %v699, %v769
        %v771 = vsub.f32 1.0, %v770
        %v772 = vmul.f32 %v769, %v771
        %v773 = vadd.f32 %v769, %v772
        %vm774 = vweird.f32 %v699
        %vm775 = vweird.f32 %v769
        %vm776 = vmor %vm774, %vm775
        %v777 = vsel %vm776, %v769, %v773
        %v778 = vand.u32 2147483647, %v699
        %vm779 = vcmp.eq.f32.partialorder %v778, 8.507059e+37
        %v780 = vand.u32 %v699, 2147483648
        %v781 = vor.u32 1.1754944e-38, %v780
        %v782 = vsel %vm779, %v781, %v777
        %v783 = vmul.f32 %v667, %v782
        %v784 = vrcp.pop %v701
        %v785 = vmul.f32 %v701, %v784
        %v786 = vsub.f32 1.0, %v785
        %v787 = vmul.f32 %v784, %v786
        %v788 = vadd.f32 %v784, %v787
        %vm789 = vweird.f32 %v701
        %vm790 = vweird.f32 %v784
        %vm791 = vmor %vm789, %vm790
        %v792 = vsel %vm791, %v784, %v788
        %v793 = vand.u32 2147483647, %v701
        %vm794 = vcmp.eq.f32.partialorder %v793, 8.507059e+37
        %v795 = vand.u32 %v701, 2147483648
        %v796 = vor.u32 1.1754944e-38, %v795
        %v797 = vsel %vm794, %v796, %v792
        %v798 = vmul.f32 %v669, %v797
        %v799 = vrcp.pop %v703
        %v800 = vmul.f32 %v703, %v799
        %v801 = vsub.f32 1.0, %v800
        %v802 = vmul.f32 %v799, %v801
        %v803 = vadd.f32 %v799, %v802
        %vm804 = vweird.f32 %v703
        %vm805 = vweird.f32 %v799
        %vm806 = vmor %vm804, %vm805
        %v807 = vsel %vm806, %v799, %v803
        %v808 = vand.u32 2147483647, %v703
        %vm809 = vcmp.eq.f32.partialorder %v808, 8.507059e+37
        %v810 = vand.u32 %v703, 2147483648
        %v811 = vor.u32 1.1754944e-38, %v810
        %v812 = vsel %vm809, %v811, %v807
        %v813 = vmul.f32 %v671, %v812
        %v814 = vrcp.pop %v705
        %v815 = vmul.f32 %v705, %v814
        %v816 = vsub.f32 1.0, %v815
        %v817 = vmul.f32 %v814, %v816
        %v818 = vadd.f32 %v814, %v817
        %vm819 = vweird.f32 %v705
        %vm820 = vweird.f32 %v814
        %vm821 = vmor %vm819, %vm820
        %v822 = vsel %vm821, %v814, %v818
        %v823 = vand.u32 2147483647, %v705
        %vm824 = vcmp.eq.f32.partialorder %v823, 8.507059e+37
        %v825 = vand.u32 %v705, 2147483648
        %v826 = vor.u32 1.1754944e-38, %v825
        %v827 = vsel %vm824, %v826, %v822
        %v828 = vmul.f32 %v673, %v827
        %v829 = vrcp.pop %v707
        %v830 = vmul.f32 %v707, %v829
        %v831 = vsub.f32 1.0, %v830
        %v832 = vmul.f32 %v829, %v831
        %v833 = vadd.f32 %v829, %v832
        %vm834 = vweird.f32 %v707
        %vm835 = vweird.f32 %v829
        %vm836 = vmor %vm834, %vm835
        %v837 = vsel %vm836, %v829, %v833
        %v838 = vand.u32 2147483647, %v707
        %vm839 = vcmp.eq.f32.partialorder %v838, 8.507059e+37
        %v840 = vand.u32 %v707, 2147483648
        %v841 = vor.u32 1.1754944e-38, %v840
        %v842 = vsel %vm839, %v841, %v837
        %v843 = vmul.f32 %v675, %v842
        %v844 = vrcp.pop %v709
        %v845 = vmul.f32 %v709, %v844
        %v846 = vsub.f32 1.0, %v845
        %v847 = vmul.f32 %v844, %v846
        %v848 = vadd.f32 %v844, %v847
        %vm849 = vweird.f32 %v709
        %vm850 = vweird.f32 %v844
        %vm851 = vmor %vm849, %vm850
        %v852 = vsel %vm851, %v844, %v848
        %v853 = vand.u32 2147483647, %v709
        %vm854 = vcmp.eq.f32.partialorder %v853, 8.507059e+37
        %v855 = vand.u32 %v709, 2147483648
        %v856 = vor.u32 1.1754944e-38, %v855
        %v857 = vsel %vm854, %v856, %v852
        %v858 = vmul.f32 %v677, %v857
        %v859 = vrcp.pop %v711
        %v860 = vmul.f32 %v711, %v859
        %v861 = vsub.f32 1.0, %v860
        %v862 = vmul.f32 %v859, %v861
        %v863 = vadd.f32 %v859, %v862
        %vm864 = vweird.f32 %v711
        %vm865 = vweird.f32 %v859
        %vm866 = vmor %vm864, %vm865
        %v867 = vsel %vm866, %v859, %v863
        %v868 = vand.u32 2147483647, %v711
        %vm869 = vcmp.eq.f32.partialorder %v868, 8.507059e+37
        %v870 = vand.u32 %v711, 2147483648
        %v871 = vor.u32 1.1754944e-38, %v870
        %v872 = vsel %vm869, %v871, %v867
        %v873 = vmul.f32 %v679, %v872
        %v874 = vrcp.pop %v713
        %v875 = vmul.f32 %v713, %v874
        %v876 = vsub.f32 1.0, %v875
        %v877 = vmul.f32 %v874, %v876
        %v878 = vadd.f32 %v874, %v877
        %vm879 = vweird.f32 %v713
        %vm880 = vweird.f32 %v874
        %vm881 = vmor %vm879, %vm880
        %v882 = vsel %vm881, %v874, %v878
        %v883 = vand.u32 2147483647, %v713
        %vm884 = vcmp.eq.f32.partialorder %v883, 8.507059e+37
        %v885 = vand.u32 %v713, 2147483648
        %v886 = vor.u32 1.1754944e-38, %v885
        %v887 = vsel %vm884, %v886, %v882
        %v888 = vmul.f32 %v681, %v887
        %v889 = vrcp.pop %v715
        %v890 = vmul.f32 %v715, %v889
        %v891 = vsub.f32 1.0, %v890
        %v892 = vmul.f32 %v889, %v891
        %v893 = vadd.f32 %v889, %v892
        %vm894 = vweird.f32 %v715
        %vm895 = vweird.f32 %v889
        %vm896 = vmor %vm894, %vm895
        %v897 = vsel %vm896, %v889, %v893
        %v898 = vand.u32 2147483647, %v715
        %vm899 = vcmp.eq.f32.partialorder %v898, 8.507059e+37
        %v900 = vand.u32 %v715, 2147483648
        %v901 = vor.u32 1.1754944e-38, %v900
        %v902 = vsel %vm899, %v901, %v897
        %v903 = vmul.f32 %v683, %v902
        %v904 = vrcp.pop %v717
        %v905 = vmul.f32 %v717, %v904
        %v906 = vsub.f32 1.0, %v905
        %v907 = vmul.f32 %v904, %v906
        %v908 = vadd.f32 %v904, %v907
        %vm909 = vweird.f32 %v717
        %vm910 = vweird.f32 %v904
        %vm911 = vmor %vm909, %vm910
        %v912 = vsel %vm911, %v904, %v908
        %v913 = vand.u32 2147483647, %v717
        %vm914 = vcmp.eq.f32.partialorder %v913, 8.507059e+37
        %v915 = vand.u32 %v717, 2147483648
        %v916 = vor.u32 1.1754944e-38, %v915
        %v917 = vsel %vm914, %v916, %v912
        %v918 = vmul.f32 %v685, %v917
        %v919 = vrcp.pop %v719
        %v920 = vmul.f32 %v719, %v919
        %v921 = vsub.f32 1.0, %v920
        %v922 = vmul.f32 %v919, %v921
        %v923 = vadd.f32 %v919, %v922
        %vm924 = vweird.f32 %v719
        %vm925 = vweird.f32 %v919
        %vm926 = vmor %vm924, %vm925
        %v927 = vsel %vm926, %v919, %v923
        %v928 = vand.u32 2147483647, %v719
        %vm929 = vcmp.eq.f32.partialorder %v928, 8.507059e+37
        %v930 = vand.u32 %v719, 2147483648
        %v931 = vor.u32 1.1754944e-38, %v930
        %v932 = vsel %vm929, %v931, %v927
        %v933 = vmul.f32 %v687, %v932
        %v934 = vrcp.pop %v721
        %v935 = vmul.f32 %v721, %v934
        %v936 = vsub.f32 1.0, %v935
        %v937 = vmul.f32 %v934, %v936
        %v938 = vadd.f32 %v934, %v937
        %vm939 = vweird.f32 %v721
        %vm940 = vweird.f32 %v934
        %vm941 = vmor %vm939, %vm940
        %v942 = vsel %vm941, %v934, %v938
        %v943 = vand.u32 2147483647, %v721
        %vm944 = vcmp.eq.f32.partialorder %v943, 8.507059e+37
        %v945 = vand.u32 %v721, 2147483648
        %v946 = vor.u32 1.1754944e-38, %v945
        %v947 = vsel %vm944, %v946, %v942
        %v948 = vmul.f32 %v689, %v947
        %v949 = vrcp.pop %v723
        %v950 = vmul.f32 %v723, %v949
        %v951 = vsub.f32 1.0, %v950
        %v952 = vmul.f32 %v949, %v951
        %v953 = vadd.f32 %v949, %v952
        %vm954 = vweird.f32 %v723
        %vm955 = vweird.f32 %v949
        %vm956 = vmor %vm954, %vm955
        %v957 = vsel %vm956, %v949, %v953
        %v958 = vand.u32 2147483647, %v723
        %vm959 = vcmp.eq.f32.partialorder %v958, 8.507059e+37
        %v960 = vand.u32 %v723, 2147483648
        %v961 = vor.u32 1.1754944e-38, %v960
        %v962 = vsel %vm959, %v961, %v957
        %v963 = vmul.f32 %v691, %v962
        %v964 = vmul.f32 %v738, %v418
        %v965 = vmul.f32 %v753, %v419
        %v966 = vmul.f32 %v768, %v420
        %v967 = vmul.f32 %v783, %v421
        %v968 = vmul.f32 %v798, %v422
        %v969 = vmul.f32 %v813, %v423
        %v970 = vmul.f32 %v828, %v424
        %v971 = vmul.f32 %v843, %v425
        %v972 = vmul.f32 %v858, %v426
        %v973 = vmul.f32 %v873, %v427
        %v974 = vmul.f32 %v888, %v428
        %v975 = vmul.f32 %v903, %v429
        %v976 = vmul.f32 %v918, %v430
        %v977 = vmul.f32 %v933, %v431
        %v978 = vmul.f32 %v948, %v432
        %v979 = vmul.f32 %v963, %v433
        %980 = vadd.xlane.f32.xlu0 %v964
        %v981 = vpop.xlane.xlu0 %980
        %982 = vadd.xlane.f32.xlu0 %v965
        %v983 = vpop.xlane.xlu0 %982
        %984 = vadd.xlane.f32.xlu0 %v966
        %v985 = vpop.xlane.xlu0 %984
        %986 = vadd.xlane.f32.xlu0 %v967
        %v987 = vpop.xlane.xlu0 %986
        %988 = vadd.xlane.f32.xlu0 %v968
        %v989 = vpop.xlane.xlu0 %988
        %990 = vadd.xlane.f32.xlu0 %v969
        %v991 = vpop.xlane.xlu0 %990
        %992 = vadd.xlane.f32.xlu0 %v970
        %v993 = vpop.xlane.xlu0 %992
        %994 = vadd.xlane.f32.xlu0 %v971
        %v995 = vpop.xlane.xlu0 %994
        %996 = vadd.xlane.f32.xlu0 %v972
        %v997 = vpop.xlane.xlu0 %996
        %998 = vadd.xlane.f32.xlu0 %v973
        %v999 = vpop.xlane.xlu0 %998
        %1000 = vadd.xlane.f32.xlu0 %v974
        %v1001 = vpop.xlane.xlu0 %1000
        %1002 = vadd.xlane.f32.xlu0 %v975
        %v1003 = vpop.xlane.xlu0 %1002
        %1004 = vadd.xlane.f32.xlu0 %v976
        %v1005 = vpop.xlane.xlu0 %1004
        %1006 = vadd.xlane.f32.xlu0 %v977
        %v1007 = vpop.xlane.xlu0 %1006
        %1008 = vadd.xlane.f32.xlu0 %v978
        %v1009 = vpop.xlane.xlu0 %1008
        %1010 = vadd.xlane.f32.xlu0 %v979
        %v1011 = vpop.xlane.xlu0 %1010
        %v1012 = vadd.f32 %v981, 1e-13
        %v1013 = vadd.f32 %v983, 1e-13
        %v1014 = vadd.f32 %v985, 1e-13
        %v1015 = vadd.f32 %v987, 1e-13
        %v1016 = vadd.f32 %v989, 1e-13
        %v1017 = vadd.f32 %v991, 1e-13
        %v1018 = vadd.f32 %v993, 1e-13
        %v1019 = vadd.f32 %v995, 1e-13
        %v1020 = vadd.f32 %v997, 1e-13
        %v1021 = vadd.f32 %v999, 1e-13
        %v1022 = vadd.f32 %v1001, 1e-13
        %v1023 = vadd.f32 %v1003, 1e-13
        %v1024 = vadd.f32 %v1005, 1e-13
        %v1025 = vadd.f32 %v1007, 1e-13
        %v1026 = vadd.f32 %v1009, 1e-13
        %v1027 = vadd.f32 %v1011, 1e-13
        %v1028 = vrcp.pop %v1012
        %v1029 = vmul.f32 %v1012, %v1028
        %v1030 = vsub.f32 1.0, %v1029
        %v1031 = vmul.f32 %v1028, %v1030
        %v1032 = vadd.f32 %v1028, %v1031
        %vm1033 = vweird.f32 %v1012
        %vm1034 = vweird.f32 %v1028
        %vm1035 = vmor %vm1033, %vm1034
        %v1036 = vsel %vm1035, %v1028, %v1032
        %v1037 = vand.u32 2147483647, %v1012
        %vm1038 = vcmp.eq.f32.partialorder %v1037, 8.507059e+37
        %v1039 = vand.u32 %v1012, 2147483648
        %v1040 = vor.u32 1.1754944e-38, %v1039
        %v1041 = vsel %vm1038, %v1040, %v1036
        %v1042 = vmul.f32 %v964, %v1041
        %v1043 = vrcp.pop %v1013
        %v1044 = vmul.f32 %v1013, %v1043
        %v1045 = vsub.f32 1.0, %v1044
        %v1046 = vmul.f32 %v1043, %v1045
        %v1047 = vadd.f32 %v1043, %v1046
        %vm1048 = vweird.f32 %v1013
        %vm1049 = vweird.f32 %v1043
        %vm1050 = vmor %vm1048, %vm1049
        %v1051 = vsel %vm1050, %v1043, %v1047
        %v1052 = vand.u32 2147483647, %v1013
        %vm1053 = vcmp.eq.f32.partialorder %v1052, 8.507059e+37
        %v1054 = vand.u32 %v1013, 2147483648
        %v1055 = vor.u32 1.1754944e-38, %v1054
        %v1056 = vsel %vm1053, %v1055, %v1051
        %v1057 = vmul.f32 %v965, %v1056
        %v1058 = vrcp.pop %v1014
        %v1059 = vmul.f32 %v1014, %v1058
        %v1060 = vsub.f32 1.0, %v1059
        %v1061 = vmul.f32 %v1058, %v1060
        %v1062 = vadd.f32 %v1058, %v1061
        %vm1063 = vweird.f32 %v1014
        %vm1064 = vweird.f32 %v1058
        %vm1065 = vmor %vm1063, %vm1064
        %v1066 = vsel %vm1065, %v1058, %v1062
        %v1067 = vand.u32 2147483647, %v1014
        %vm1068 = vcmp.eq.f32.partialorder %v1067, 8.507059e+37
        %v1069 = vand.u32 %v1014, 2147483648
        %v1070 = vor.u32 1.1754944e-38, %v1069
        %v1071 = vsel %vm1068, %v1070, %v1066
        %v1072 = vmul.f32 %v966, %v1071
        %v1073 = vrcp.pop %v1015
        %v1074 = vmul.f32 %v1015, %v1073
        %v1075 = vsub.f32 1.0, %v1074
        %v1076 = vmul.f32 %v1073, %v1075
        %v1077 = vadd.f32 %v1073, %v1076
        %vm1078 = vweird.f32 %v1015
        %vm1079 = vweird.f32 %v1073
        %vm1080 = vmor %vm1078, %vm1079
        %v1081 = vsel %vm1080, %v1073, %v1077
        %v1082 = vand.u32 2147483647, %v1015
        %vm1083 = vcmp.eq.f32.partialorder %v1082, 8.507059e+37
        %v1084 = vand.u32 %v1015, 2147483648
        %v1085 = vor.u32 1.1754944e-38, %v1084
        %v1086 = vsel %vm1083, %v1085, %v1081
        %v1087 = vmul.f32 %v967, %v1086
        %v1088 = vrcp.pop %v1016
        %v1089 = vmul.f32 %v1016, %v1088
        %v1090 = vsub.f32 1.0, %v1089
        %v1091 = vmul.f32 %v1088, %v1090
        %v1092 = vadd.f32 %v1088, %v1091
        %vm1093 = vweird.f32 %v1016
        %vm1094 = vweird.f32 %v1088
        %vm1095 = vmor %vm1093, %vm1094
        %v1096 = vsel %vm1095, %v1088, %v1092
        %v1097 = vand.u32 2147483647, %v1016
        %vm1098 = vcmp.eq.f32.partialorder %v1097, 8.507059e+37
        %v1099 = vand.u32 %v1016, 2147483648
        %v1100 = vor.u32 1.1754944e-38, %v1099
        %v1101 = vsel %vm1098, %v1100, %v1096
        %v1102 = vmul.f32 %v968, %v1101
        %v1103 = vrcp.pop %v1017
        %v1104 = vmul.f32 %v1017, %v1103
        %v1105 = vsub.f32 1.0, %v1104
        %v1106 = vmul.f32 %v1103, %v1105
        %v1107 = vadd.f32 %v1103, %v1106
        %vm1108 = vweird.f32 %v1017
        %vm1109 = vweird.f32 %v1103
        %vm1110 = vmor %vm1108, %vm1109
        %v1111 = vsel %vm1110, %v1103, %v1107
        %v1112 = vand.u32 2147483647, %v1017
        %vm1113 = vcmp.eq.f32.partialorder %v1112, 8.507059e+37
        %v1114 = vand.u32 %v1017, 2147483648
        %v1115 = vor.u32 1.1754944e-38, %v1114
        %v1116 = vsel %vm1113, %v1115, %v1111
        %v1117 = vmul.f32 %v969, %v1116
        %v1118 = vrcp.pop %v1018
        %v1119 = vmul.f32 %v1018, %v1118
        %v1120 = vsub.f32 1.0, %v1119
        %v1121 = vmul.f32 %v1118, %v1120
        %v1122 = vadd.f32 %v1118, %v1121
        %vm1123 = vweird.f32 %v1018
        %vm1124 = vweird.f32 %v1118
        %vm1125 = vmor %vm1123, %vm1124
        %v1126 = vsel %vm1125, %v1118, %v1122
        %v1127 = vand.u32 2147483647, %v1018
        %vm1128 = vcmp.eq.f32.partialorder %v1127, 8.507059e+37
        %v1129 = vand.u32 %v1018, 2147483648
        %v1130 = vor.u32 1.1754944e-38, %v1129
        %v1131 = vsel %vm1128, %v1130, %v1126
        %v1132 = vmul.f32 %v970, %v1131
        %v1133 = vrcp.pop %v1019
        %v1134 = vmul.f32 %v1019, %v1133
        %v1135 = vsub.f32 1.0, %v1134
        %v1136 = vmul.f32 %v1133, %v1135
        %v1137 = vadd.f32 %v1133, %v1136
        %vm1138 = vweird.f32 %v1019
        %vm1139 = vweird.f32 %v1133
        %vm1140 = vmor %vm1138, %vm1139
        %v1141 = vsel %vm1140, %v1133, %v1137
        %v1142 = vand.u32 2147483647, %v1019
        %vm1143 = vcmp.eq.f32.partialorder %v1142, 8.507059e+37
        %v1144 = vand.u32 %v1019, 2147483648
        %v1145 = vor.u32 1.1754944e-38, %v1144
        %v1146 = vsel %vm1143, %v1145, %v1141
        %v1147 = vmul.f32 %v971, %v1146
        %v1148 = vrcp.pop %v1020
        %v1149 = vmul.f32 %v1020, %v1148
        %v1150 = vsub.f32 1.0, %v1149
        %v1151 = vmul.f32 %v1148, %v1150
        %v1152 = vadd.f32 %v1148, %v1151
        %vm1153 = vweird.f32 %v1020
        %vm1154 = vweird.f32 %v1148
        %vm1155 = vmor %vm1153, %vm1154
        %v1156 = vsel %vm1155, %v1148, %v1152
        %v1157 = vand.u32 2147483647, %v1020
        %vm1158 = vcmp.eq.f32.partialorder %v1157, 8.507059e+37
        %v1159 = vand.u32 %v1020, 2147483648
        %v1160 = vor.u32 1.1754944e-38, %v1159
        %v1161 = vsel %vm1158, %v1160, %v1156
        %v1162 = vmul.f32 %v972, %v1161
        %v1163 = vrcp.pop %v1021
        %v1164 = vmul.f32 %v1021, %v1163
        %v1165 = vsub.f32 1.0, %v1164
        %v1166 = vmul.f32 %v1163, %v1165
        %v1167 = vadd.f32 %v1163, %v1166
        %vm1168 = vweird.f32 %v1021
        %vm1169 = vweird.f32 %v1163
        %vm1170 = vmor %vm1168, %vm1169
        %v1171 = vsel %vm1170, %v1163, %v1167
        %v1172 = vand.u32 2147483647, %v1021
        %vm1173 = vcmp.eq.f32.partialorder %v1172, 8.507059e+37
        %v1174 = vand.u32 %v1021, 2147483648
        %v1175 = vor.u32 1.1754944e-38, %v1174
        %v1176 = vsel %vm1173, %v1175, %v1171
        %v1177 = vmul.f32 %v973, %v1176
        %v1178 = vrcp.pop %v1022
        %v1179 = vmul.f32 %v1022, %v1178
        %v1180 = vsub.f32 1.0, %v1179
        %v1181 = vmul.f32 %v1178, %v1180
        %v1182 = vadd.f32 %v1178, %v1181
        %vm1183 = vweird.f32 %v1022
        %vm1184 = vweird.f32 %v1178
        %vm1185 = vmor %vm1183, %vm1184
        %v1186 = vsel %vm1185, %v1178, %v1182
        %v1187 = vand.u32 2147483647, %v1022
        %vm1188 = vcmp.eq.f32.partialorder %v1187, 8.507059e+37
        %v1189 = vand.u32 %v1022, 2147483648
        %v1190 = vor.u32 1.1754944e-38, %v1189
        %v1191 = vsel %vm1188, %v1190, %v1186
        %v1192 = vmul.f32 %v974, %v1191
        %v1193 = vrcp.pop %v1023
        %v1194 = vmul.f32 %v1023, %v1193
        %v1195 = vsub.f32 1.0, %v1194
        %v1196 = vmul.f32 %v1193, %v1195
        %v1197 = vadd.f32 %v1193, %v1196
        %vm1198 = vweird.f32 %v1023
        %vm1199 = vweird.f32 %v1193
        %vm1200 = vmor %vm1198, %vm1199
        %v1201 = vsel %vm1200, %v1193, %v1197
        %v1202 = vand.u32 2147483647, %v1023
        %vm1203 = vcmp.eq.f32.partialorder %v1202, 8.507059e+37
        %v1204 = vand.u32 %v1023, 2147483648
        %v1205 = vor.u32 1.1754944e-38, %v1204
        %v1206 = vsel %vm1203, %v1205, %v1201
        %v1207 = vmul.f32 %v975, %v1206
        %v1208 = vrcp.pop %v1024
        %v1209 = vmul.f32 %v1024, %v1208
        %v1210 = vsub.f32 1.0, %v1209
        %v1211 = vmul.f32 %v1208, %v1210
        %v1212 = vadd.f32 %v1208, %v1211
        %vm1213 = vweird.f32 %v1024
        %vm1214 = vweird.f32 %v1208
        %vm1215 = vmor %vm1213, %vm1214
        %v1216 = vsel %vm1215, %v1208, %v1212
        %v1217 = vand.u32 2147483647, %v1024
        %vm1218 = vcmp.eq.f32.partialorder %v1217, 8.507059e+37
        %v1219 = vand.u32 %v1024, 2147483648
        %v1220 = vor.u32 1.1754944e-38, %v1219
        %v1221 = vsel %vm1218, %v1220, %v1216
        %v1222 = vmul.f32 %v976, %v1221
        %v1223 = vrcp.pop %v1025
        %v1224 = vmul.f32 %v1025, %v1223
        %v1225 = vsub.f32 1.0, %v1224
        %v1226 = vmul.f32 %v1223, %v1225
        %v1227 = vadd.f32 %v1223, %v1226
        %vm1228 = vweird.f32 %v1025
        %vm1229 = vweird.f32 %v1223
        %vm1230 = vmor %vm1228, %vm1229
        %v1231 = vsel %vm1230, %v1223, %v1227
        %v1232 = vand.u32 2147483647, %v1025
        %vm1233 = vcmp.eq.f32.partialorder %v1232, 8.507059e+37
        %v1234 = vand.u32 %v1025, 2147483648
        %v1235 = vor.u32 1.1754944e-38, %v1234
        %v1236 = vsel %vm1233, %v1235, %v1231
        %v1237 = vmul.f32 %v977, %v1236
        %v1238 = vrcp.pop %v1026
        %v1239 = vmul.f32 %v1026, %v1238
        %v1240 = vsub.f32 1.0, %v1239
        %v1241 = vmul.f32 %v1238, %v1240
        %v1242 = vadd.f32 %v1238, %v1241
        %vm1243 = vweird.f32 %v1026
        %vm1244 = vweird.f32 %v1238
        %vm1245 = vmor %vm1243, %vm1244
        %v1246 = vsel %vm1245, %v1238, %v1242
        %v1247 = vand.u32 2147483647, %v1026
        %vm1248 = vcmp.eq.f32.partialorder %v1247, 8.507059e+37
        %v1249 = vand.u32 %v1026, 2147483648
        %v1250 = vor.u32 1.1754944e-38, %v1249
        %v1251 = vsel %vm1248, %v1250, %v1246
        %v1252 = vmul.f32 %v978, %v1251
        %v1253 = vrcp.pop %v1027
        %v1254 = vmul.f32 %v1027, %v1253
        %v1255 = vsub.f32 1.0, %v1254
        %v1256 = vmul.f32 %v1253, %v1255
        %v1257 = vadd.f32 %v1253, %v1256
        %vm1258 = vweird.f32 %v1027
        %vm1259 = vweird.f32 %v1253
        %vm1260 = vmor %vm1258, %vm1259
        %v1261 = vsel %vm1260, %v1253, %v1257
        %v1262 = vand.u32 2147483647, %v1027
        %vm1263 = vcmp.eq.f32.partialorder %v1262, 8.507059e+37
        %v1264 = vand.u32 %v1027, 2147483648
        %v1265 = vor.u32 1.1754944e-38, %v1264
        %v1266 = vsel %vm1263, %v1265, %v1261
        %v1267 = vmul.f32 %v979, %v1266
        %1268 = vst [vmem:[%s312] sm:$0xff] %v1042
        %1269 = vst [vmem:[%s312 + $0x8] sm:$0xff] %v1057
        %1270 = vst [vmem:[%s312 + $0x10] sm:$0xff] %v1072
        %1271 = vst [vmem:[%s312 + $0x18] sm:$0xff] %v1087
        %1272 = vst [vmem:[%s312 + $0x20] sm:$0xff] %v1102
        %1273 = vst [vmem:[%s312 + $0x28] sm:$0xff] %v1117
        %1274 = vst [vmem:[%s312 + $0x30] sm:$0xff] %v1132
        %1275 = vst [vmem:[%s312 + $0x38] sm:$0xff] %v1147
        %1276 = vst [vmem:[%s312 + $0x40] sm:$0xff] %v1162
        %1277 = vst [vmem:[%s312 + $0x48] sm:$0xff] %v1177
        %1278 = vst [vmem:[%s312 + $0x50] sm:$0xff] %v1192
        %1279 = vst [vmem:[%s312 + $0x58] sm:$0xff] %v1207
        %1280 = vst [vmem:[%s312 + $0x60] sm:$0xff] %v1222
        %1281 = vst [vmem:[%s312 + $0x68] sm:$0xff] %v1237
        %1282 = vst [vmem:[%s312 + $0x70] sm:$0xff] %v1252
        %1283 = vst [vmem:[%s312 + $0x78] sm:$0xff] %v1267
        %1284 = vmatpush.msra.mxu0 %v417
        %1285 = vmatpush.msra.mxu0 %v416
        %1286 = vmatpush.msra.mxu0 %v415
        %1287 = vmatpush.msra.mxu0 %v414
        %1288 = vmatpush.msra.mxu0 %v413
        %1289 = vmatpush.msra.mxu0 %v412
        %1290 = vmatpush.msra.mxu0 %v411
        %1291 = vmatpush.msra.mxu0 %v410
        %1292 = vmatpush.msra.mxu0 %v409
        %1293 = vmatpush.msra.mxu0 %v408
        %1294 = vmatpush.msra.mxu0 %v407
        %1295 = vmatpush.msra.mxu0 %v406
        %1296 = vmatpush.msra.mxu0 %v405
        %1297 = vmatpush.msra.mxu0 %v404
        %1298 = vmatpush.msra.mxu0 %v403
        %1299 = vmatpush.msra.mxu0 %v402
        %1300 = vmatmul.f32.gmra.mxu0 %v1042
        %v1301 = vpop.f32.mrf.mxu0
        %v1302 = vadd.f32 0.0, %v1301
        %1303 = vmatmul.f32.gmra.mxu0 %v1057
        %v1304 = vpop.f32.mrf.mxu0
        %v1305 = vadd.f32 0.0, %v1304
        %1306 = vmatmul.f32.gmra.mxu0 %v1072
        %v1307 = vpop.f32.mrf.mxu0
        %v1308 = vadd.f32 0.0, %v1307
        %1309 = vmatmul.f32.gmra.mxu0 %v1087
        %v1310 = vpop.f32.mrf.mxu0
        %v1311 = vadd.f32 0.0, %v1310
        %1312 = vmatmul.f32.gmra.mxu0 %v1102
        %v1313 = vpop.f32.mrf.mxu0
        %v1314 = vadd.f32 0.0, %v1313
        %1315 = vmatmul.f32.gmra.mxu0 %v1117
        %v1316 = vpop.f32.mrf.mxu0
        %v1317 = vadd.f32 0.0, %v1316
        %1318 = vmatmul.f32.gmra.mxu0 %v1132
        %v1319 = vpop.f32.mrf.mxu0
        %v1320 = vadd.f32 0.0, %v1319
        %1321 = vmatmul.f32.gmra.mxu0 %v1147
        %v1322 = vpop.f32.mrf.mxu0
        %v1323 = vadd.f32 0.0, %v1322
        %1324 = vmatmul.f32.gmra.mxu0 %v1162
        %v1325 = vpop.f32.mrf.mxu0
        %v1326 = vadd.f32 0.0, %v1325
        %1327 = vmatmul.f32.gmra.mxu0 %v1177
        %v1328 = vpop.f32.mrf.mxu0
        %v1329 = vadd.f32 0.0, %v1328
        %1330 = vmatmul.f32.gmra.mxu0 %v1192
        %v1331 = vpop.f32.mrf.mxu0
        %v1332 = vadd.f32 0.0, %v1331
        %1333 = vmatmul.f32.gmra.mxu0 %v1207
        %v1334 = vpop.f32.mrf.mxu0
        %v1335 = vadd.f32 0.0, %v1334
        %1336 = vmatmul.f32.gmra.mxu0 %v1222
        %v1337 = vpop.f32.mrf.mxu0
        %v1338 = vadd.f32 0.0, %v1337
        %1339 = vmatmul.f32.gmra.mxu0 %v1237
        %v1340 = vpop.f32.mrf.mxu0
        %v1341 = vadd.f32 0.0, %v1340
        %1342 = vmatmul.f32.gmra.mxu0 %v1252
        %v1343 = vpop.f32.mrf.mxu0
        %v1344 = vadd.f32 0.0, %v1343
        %1345 = vmatmul.f32.gmra.mxu0 %v1267
        %v1346 = vpop.f32.mrf.mxu0
        %v1347 = vadd.f32 0.0, %v1346
        %1348 = vdwg.mxu0
        %1349 = vst.msk [vmem:[%s351] sm:$0xff] %vm434, %v1302
        %1350 = vst.msk [vmem:[%s351 + $0x8] sm:$0xff] %vm434, %v1305
        %1351 = vst.msk [vmem:[%s351 + $0x10] sm:$0xff] %vm434, %v1308
        %1352 = vst.msk [vmem:[%s351 + $0x18] sm:$0xff] %vm434, %v1311
        %1353 = vst.msk [vmem:[%s351 + $0x20] sm:$0xff] %vm434, %v1314
        %1354 = vst.msk [vmem:[%s351 + $0x28] sm:$0xff] %vm434, %v1317
        %1355 = vst.msk [vmem:[%s351 + $0x30] sm:$0xff] %vm434, %v1320
        %1356 = vst.msk [vmem:[%s351 + $0x38] sm:$0xff] %vm434, %v1323
        %1357 = vst.msk [vmem:[%s351 + $0x40] sm:$0xff] %vm434, %v1326
        %1358 = vst.msk [vmem:[%s351 + $0x48] sm:$0xff] %vm434, %v1329
        %1359 = vst.msk [vmem:[%s351 + $0x50] sm:$0xff] %vm434, %v1332
        %1360 = vst.msk [vmem:[%s351 + $0x58] sm:$0xff] %vm434, %v1335
        %1361 = vst.msk [vmem:[%s351 + $0x60] sm:$0xff] %vm434, %v1338
        %1362 = vst.msk [vmem:[%s351 + $0x68] sm:$0xff] %vm434, %v1341
        %1363 = vst.msk [vmem:[%s351 + $0x70] sm:$0xff] %vm434, %v1344
        %1364 = vst.msk [vmem:[%s351 + $0x78] sm:$0xff] %vm434, %v1347
        %s1365 = smul.u32 16, %s25
        %p1366 = scmp.lt.s32.totalorder %s24, 3
        %s1367 = scalar_select %p1366, %s24, 3
        %p1368 = scmp.lt.s32.totalorder %s1365, 15
        %s1369 = scalar_select %p1368, %s1365, 15
        %s1370 = smul.addr %s1367, 16
        %s1371 = sadd.s32 %s1369, %s1370
        %s1372 = smul.addr %s1371, 8
        %s1373 = scalar_lea.vmem %s4, %s1372
        %s1374 = sand.u32 %s178, 1
        %s1375 = scalar_lea.sflag [#allocation3], %s1374
        %s1376 = sand.u32 %s178, 1
        %s1377 = smul.addr %s1376, 128
        %s1378 = scalar_lea.vmem [#allocation2], %s1377
        // Predicated region
        $region37: #{tpu_custom_call.1} parent=35 // pred_check
          %p1379 = pneg %p160
        $region38: #{tpu_custom_call.1} parent=35 // pred_check_branch
          %1381 = sbr.rel (%p1379) target = $region40
        $region39: #{tpu_custom_call.1} parent=35 // pred_region
          %s1382 = smul.u32 16, %s25
        $region40: #{tpu_custom_call.1} parent=35 // pred_fallthru
          _
        // Predicated region
        $region41: #{tpu_custom_call.1} parent=35 // pred_check
          %p1383 = pneg %p188
        $region42: #{tpu_custom_call.1} parent=35 // pred_check_branch
          %1385 = sbr.rel (%p1383) target = $region44
        $region43: #{tpu_custom_call.1} parent=35 // pred_region
          %s1386 = smul.u32 16, %s25
          %1388 = vsyncadd %s1375, 0
          %s1389 = smul.addr %s24, 16
          %s1390 = sadd.s32 %s1386, %s1389
          %s1391 = smul.addr %s1390, 8
          %s1392 = scalar_lea.hbm %s5, %s1391
          %s1393 = sshll.u32 %s1378, 4
          %s1394 = int_to_ptr.vmem [resolvable:$true] %s1393
          %s1395 = sshll.u32 %s1392, 4
          %s1396 = int_to_ptr.hbm [resolvable:$true] %s1395
          %1401 = dma.vmem_to_hbm [thread:$0]  %s1394, 2048, %s1396, %s1375, 128, 128, 8
        $region44: #{tpu_custom_call.1} parent=35 // pred_fallthru
          _
      $region36: #{tpu_custom_call.1} parent=5 // pred_fallthru
        _
      %p1402 = scmp.le.s32.totalorder 2, %s15
      // Predicated region
      $region45: #{tpu_custom_call.1} parent=5 // pred_check
        %p1403 = pneg %p1402
      $region46: #{tpu_custom_call.1} parent=5 // pred_check_branch
        %1405 = sbr.rel (%p1403) target = $region48
      $region47: #{tpu_custom_call.1} parent=5 // pred_region
        %s1406 = ssub.s32 %s15, 2
        // Predicated region
        $region49: #{tpu_custom_call.1} parent=47 // pred_check
          %p1407 = pneg %p166
        $region50: #{tpu_custom_call.1} parent=47 // pred_check_branch
          %1409 = sbr.rel (%p1407) target = $region52
        $region51: #{tpu_custom_call.1} parent=47 // pred_region
          %s1410 = smul.u32 16, %s27
          %p1411 = scmp.lt.s32.totalorder %s26, 3
          %s1412 = scalar_select %p1411, %s26, 3
          %p1413 = scmp.lt.s32.totalorder %s1410, 15
          %s1414 = scalar_select %p1413, %s1410, 15
          %s1415 = smul.addr %s1412, 16
          %s1416 = sadd.s32 %s1414, %s1415
          %s1417 = smul.addr %s1416, 8
          %s1418 = scalar_lea.vmem %s4, %s1417
        $region52: #{tpu_custom_call.1} parent=47 // pred_fallthru
          _
        // Predicated region
        $region53: #{tpu_custom_call.1} parent=47 // pred_check
          %p1419 = pneg %p194
        $region54: #{tpu_custom_call.1} parent=47 // pred_check_branch
          %1421 = sbr.rel (%p1419) target = $region56
        $region55: #{tpu_custom_call.1} parent=47 // pred_region
          %s1422 = sand.u32 %s179, 1
          %s1423 = scalar_lea.sflag [#allocation3], %s1422
          %s1424 = sand.u32 %s179, 1
          %s1425 = smul.addr %s1424, 128
          %s1426 = scalar_lea.vmem [#allocation2], %s1425
          %1428 = dma.done %s1423, 2048
        $region56: #{tpu_custom_call.1} parent=47 // pred_fallthru
          _
      $region48: #{tpu_custom_call.1} parent=5 // pred_fallthru
        _
    $region6: #{tpu_custom_call.1} parent=1 // loop_footer
      %s19 = sadd.s32 1, %s15
    $region7: #{tpu_custom_call.1} parent=1 // loop_footer_branch
      %14 = sbr.rel target = $region3
    $region8: #{tpu_custom_call.1} parent=1 // loop_exit
      _
    %1429 = vsyncpa [#allocation3], 1
    %s1430 = scalar_lea.sflag [#allocation3], 1
    %1431 = vsyncpa %s1430, 1

</llo_original>
